<compile_context>
chip_gen: v5e
topology: v5e:2x2
jax: 0.10.0
libtpu: 0.0.40
codegen_flags: <defaults>
</compile_context>

<pallas_src>
import jax
import jax.numpy as jnp
from jax.experimental import pallas as pl
from jax.experimental.pallas import tpu as pltpu

BN_EPS = 1e-5
LEAKY_SLOPE = 0.2


def linear_unit_kernel(x_ref, w_ref, b_ref, g_ref, be_ref, o_ref, acc_ref):
    # Grid = (F_out tiles, K tiles); K (reduction) is the last, "arbitrary" axis.
    k = pl.program_id(1)

    @pl.when(k == 0)
    def _init():
        acc_ref[...] = jnp.zeros_like(acc_ref)

    # MXU: accumulate this K-slice of x @ W_t in f32.
    acc_ref[...] += jnp.dot(
        x_ref[...], w_ref[...], preferred_element_type=jnp.float32
    )

    @pl.when(k == pl.num_programs(1) - 1)
    def _finalize():
        y = acc_ref[...] + b_ref[...]  # (N, tn), f32

        # BatchNorm1d, training mode: batch mean / biased batch variance.
        mean = jnp.mean(y, axis=0, keepdims=True)
        centered = y - mean
        var = jnp.mean(centered * centered, axis=0, keepdims=True)

        # Fused BN affine: z = y * scale + shift.
        scale = jax.lax.rsqrt(var + BN_EPS) * g_ref[...]
        shift = be_ref[...] - mean * scale
        z = y * scale + shift

        # LeakyReLU(0.2): slope in (0, 1) => max(z, slope * z).
        o_ref[...] = jnp.maximum(z, LEAKY_SLOPE * z).astype(o_ref.dtype)


def _round_up(v, m):
    return ((v + m - 1) // m) * m


def linear_unit(x, w_t, b, gamma, beta):
    """x: (N, F_in); w_t: (F_in, F_out); b/gamma/beta: (F_out,). Returns (N, F_out)."""
    n, f_in = x.shape
    f_out = w_t.shape[1]
    out_dtype = x.dtype

    # Lane-dense padding / tile choice: 256-aligned when possible (v6e/v7x MXU),
    # otherwise 128-aligned (v5e-friendly, still full lanes).
    f_in_p = _round_up(f_in, 128)
    f_out_p = _round_up(f_out, 128)
    tk = 256 if f_in_p % 256 == 0 else 128
    tn = 256 if f_out_p % 256 == 0 else 128

    # Zero-pad: padded K rows/cols contribute 0 to the matmul; padded F_out
    # columns are independent under per-feature BN and are sliced away below.
    if f_in_p != f_in:
        x = jnp.pad(x, ((0, 0), (0, f_in_p - f_in)))
        w_t = jnp.pad(w_t, ((0, f_in_p - f_in), (0, 0)))
    if f_out_p != f_out:
        w_t = jnp.pad(w_t, ((0, 0), (0, f_out_p - f_out)))
        b = jnp.pad(b, (0, f_out_p - f_out))
        gamma = jnp.pad(gamma, (0, f_out_p - f_out))
        beta = jnp.pad(beta, (0, f_out_p - f_out))

    # BN parameters / bias kept in f32 even if x / w_t are bf16 (matmul still
    # accumulates in f32 via preferred_element_type).
    b2 = b.reshape(1, f_out_p).astype(jnp.float32)
    g2 = gamma.reshape(1, f_out_p).astype(jnp.float32)
    be2 = beta.reshape(1, f_out_p).astype(jnp.float32)

    grid = (f_out_p // tn, f_in_p // tk)

    elt = jnp.dtype(x.dtype).itemsize
    # Double-buffered tiles + f32 accumulator, with 2x headroom; floor 16 MiB,
    # capped at the most conservative scoped budget (v7x: 32 MiB).
    live = 2 * (n * tk * elt + tk * tn * elt + n * tn * elt + 3 * tn * 4) + n * tn * 4
    vmem_limit = int(min(32 * 1024 * 1024, max(2 * live, 16 * 1024 * 1024)))

    cost = pl.CostEstimate(
        flops=2 * n * f_in_p * f_out_p,
        transcendentals=0,
        bytes_accessed=elt * (n * f_in_p + f_in_p * f_out_p + n * f_out_p),
    )

    vmem = pltpu.MemorySpace.VMEM
    out_padded = pl.pallas_call(
        linear_unit_kernel,
        out_shape=jax.ShapeDtypeStruct((n, f_out_p), out_dtype),
        grid_spec=pltpu.PrefetchScalarGridSpec(
            num_scalar_prefetch=0,
            grid=grid,
            in_specs=[
                pl.BlockSpec((n, tk), lambda j, k: (0, k), memory_space=vmem),
                pl.BlockSpec((tk, tn), lambda j, k: (k, j), memory_space=vmem),
                pl.BlockSpec((1, tn), lambda j, k: (0, j), memory_space=vmem),
                pl.BlockSpec((1, tn), lambda j, k: (0, j), memory_space=vmem),
                pl.BlockSpec((1, tn), lambda j, k: (0, j), memory_space=vmem),
            ],
            out_specs=pl.BlockSpec((n, tn), lambda j, k: (0, j), memory_space=vmem),
            scratch_shapes=[pltpu.VMEM((n, tn), jnp.float32)],
        ),
        compiler_params=pltpu.CompilerParams(
            dimension_semantics=("parallel", "arbitrary"),
            vmem_limit_bytes=vmem_limit,
        ),
        cost_estimate=cost,
    )(x, w_t, b2, g2, be2)

    return out_padded[:, :f_out]


def linear_unit_ref(x, w_t, b, gamma, beta):
    y = x @ w_t + b
    mean = y.mean(0, keepdims=True)
    var = ((y - mean) ** 2).mean(0, keepdims=True)
    y = (y - mean) / jnp.sqrt(var + BN_EPS) * gamma + beta
    return jnp.where(y >= 0, y, LEAKY_SLOPE * y)


if __name__ == "__main__":
    key = jax.random.PRNGKey(0)
    N, F_IN, F_OUT = 8, 32, 64

    kx, kw, kb = jax.random.split(key, 3)
    x = jax.random.normal(kx, (N, F_IN), dtype=jnp.float32)

    # Parameter init with nn.Linear(in, out) / nn.BatchNorm1d(out) shapes.
    bound = 1.0 / jnp.sqrt(F_IN)
    w = jax.random.uniform(kw, (F_OUT, F_IN), minval=-bound, maxval=bound, dtype=jnp.float32)
    b = jax.random.uniform(kb, (F_OUT,), minval=-bound, maxval=bound, dtype=jnp.float32)
    gamma = jnp.ones((F_OUT,), jnp.float32)   # BatchNorm1d weight init
    beta = jnp.zeros((F_OUT,), jnp.float32)   # BatchNorm1d bias init

    w_t = w.T  # (F_IN, F_OUT): kernel computes x @ W^T + b directly on the MXU

    out = jax.block_until_ready(linear_unit(x, w_t, b, gamma, beta))
    ref = linear_unit_ref(x, w_t, b, gamma, beta)

    assert out.shape == (N, F_OUT)
    assert jnp.allclose(out, ref, atol=1e-4, rtol=1e-4), "mismatch vs pure-JAX reference"

    print("KERNEL_OK")
</pallas_src>

<mosaic_0001>
module attributes {stable_mosaic.version = 11 : i64} {
  func.func @linear_unit_kernel(%arg0: i32, %arg1: i32, %arg2: memref<8x128xf32, #tpu.memory_space<vmem>>, %arg3: memref<128x128xf32, #tpu.memory_space<vmem>>, %arg4: memref<1x128xf32, #tpu.memory_space<vmem>>, %arg5: memref<1x128xf32, #tpu.memory_space<vmem>>, %arg6: memref<1x128xf32, #tpu.memory_space<vmem>>, %arg7: memref<8x128xf32, #tpu.memory_space<vmem>>, %arg8: memref<8x128xf32, #tpu.memory_space<vmem>>) attributes {dimension_semantics = [#tpu.dimension_semantics<parallel>, #tpu.dimension_semantics<arbitrary>], iteration_bounds = array<i64: 1, 1>, scalar_prefetch = 0 : i64, scratch_operands = 1 : i64, tpu.core_type = #tpu.core_type<tc>, window_params = [{transform_indices = @transform_0, window_bounds = array<i64: 8, 128>}, {transform_indices = @transform_1, window_bounds = array<i64: 128, 128>}, {transform_indices = @transform_2, window_bounds = array<i64: 1, 128>}, {transform_indices = @transform_3, window_bounds = array<i64: 1, 128>}, {transform_indices = @transform_4, window_bounds = array<i64: 1, 128>}, {transform_indices = @transform_5, window_bounds = array<i64: 8, 128>}]} {
    %c0_i32 = arith.constant 0 : i32
    %0 = arith.cmpi eq, %arg1, %c0_i32 : i32
    %1 = arith.extui %0 : i1 to i32
    %c0_i32_0 = arith.constant 0 : i32
    %2 = arith.cmpi ne, %1, %c0_i32_0 : i32
    scf.if %2 {
      %cst_10 = arith.constant 0.000000e+00 : f32
      %12 = vector.broadcast %cst_10 : f32 to vector<8x128xf32>
      %c0_11 = arith.constant 0 : index
      %c0_12 = arith.constant 0 : index
      %13 = vector.load %arg8[%c0_11, %c0_12] : memref<8x128xf32, #tpu.memory_space<vmem>>, vector<8x128xf32>
      tpu.vector_store %arg8[%c0_11, %c0_12], %12 {strides = array<i32>} : memref<8x128xf32, #tpu.memory_space<vmem>>, vector<8x128xf32>,
    } else {
    }
    %c0 = arith.constant 0 : index
    %c0_1 = arith.constant 0 : index
    %3 = vector.load %arg8[%c0, %c0_1] : memref<8x128xf32, #tpu.memory_space<vmem>>, vector<8x128xf32>
    %c0_2 = arith.constant 0 : index
    %c0_3 = arith.constant 0 : index
    %4 = vector.load %arg2[%c0_2, %c0_3] : memref<8x128xf32, #tpu.memory_space<vmem>>, vector<8x128xf32>
    %c0_4 = arith.constant 0 : index
    %c0_5 = arith.constant 0 : index
    %5 = vector.load %arg3[%c0_4, %c0_5] : memref<128x128xf32, #tpu.memory_space<vmem>>, vector<128x128xf32>
    %cst = arith.constant dense<0.000000e+00> : vector<8x128xf32>
    %6 = tpu.matmul %4, %5, %cst {dimension_numbers = #tpu.dot_dimension_numbers<[1], [0], [0], [1], [0, 0, 1, 1], [], []>} : vector<8x128xf32>, vector<128x128xf32>, vector<8x128xf32> -> vector<8x128xf32>
    %7 = arith.addf %3, %6 : vector<8x128xf32>
    %c0_6 = arith.constant 0 : index
    %c0_7 = arith.constant 0 : index
    %8 = vector.load %arg8[%c0_6, %c0_7] : memref<8x128xf32, #tpu.memory_space<vmem>>, vector<8x128xf32>
    tpu.vector_store %arg8[%c0_6, %c0_7], %7 {strides = array<i32>} : memref<8x128xf32, #tpu.memory_space<vmem>>, vector<8x128xf32>,
    %c0_i32_8 = arith.constant 0 : i32
    %9 = arith.cmpi eq, %arg1, %c0_i32_8 : i32
    %10 = arith.extui %9 : i1 to i32
    %c0_i32_9 = arith.constant 0 : i32
    %11 = arith.cmpi ne, %10, %c0_i32_9 : i32
    scf.if %11 {
      %c0_10 = arith.constant 0 : index
      %c0_11 = arith.constant 0 : index
      %12 = vector.load %arg8[%c0_10, %c0_11] : memref<8x128xf32, #tpu.memory_space<vmem>>, vector<8x128xf32>
      %c0_12 = arith.constant 0 : index
      %c0_13 = arith.constant 0 : index
      %13 = vector.load %arg4[%c0_12, %c0_13] : memref<1x128xf32, #tpu.memory_space<vmem>>, vector<1x128xf32>
      %14 = vector.broadcast %13 : vector<1x128xf32> to vector<8x128xf32>
      %15 = arith.addf %12, %14 : vector<8x128xf32>
      %cst_14 = arith.constant dense<0.000000e+00> : vector<128xf32>
      %16 = vector.multi_reduction <add>, %15, %cst_14 [0] : vector<8x128xf32> to vector<128xf32>
      %17 = vector.shape_cast %16 : vector<128xf32> to vector<1x128xf32>
      %cst_15 = arith.constant 8.000000e+00 : f32
      %18 = vector.broadcast %cst_15 : f32 to vector<1x128xf32>
      %19 = arith.divf %17, %18 : vector<1x128xf32>
      %20 = vector.broadcast %19 : vector<1x128xf32> to vector<8x128xf32>
      %21 = arith.subf %15, %20 : vector<8x128xf32>
      %22 = arith.mulf %21, %21 : vector<8x128xf32>
      %cst_16 = arith.constant dense<0.000000e+00> : vector<128xf32>
      %23 = vector.multi_reduction <add>, %22, %cst_16 [0] : vector<8x128xf32> to vector<128xf32>
      %24 = vector.shape_cast %23 : vector<128xf32> to vector<1x128xf32>
      %cst_17 = arith.constant 8.000000e+00 : f32
      %25 = vector.broadcast %cst_17 : f32 to vector<1x128xf32>
      %26 = arith.divf %24, %25 : vector<1x128xf32>
      %cst_18 = arith.constant 9.99999974E-6 : f32
      %27 = vector.broadcast %cst_18 : f32 to vector<1x128xf32>
      %28 = arith.addf %26, %27 : vector<1x128xf32>
      %29 = math.rsqrt %28 : vector<1x128xf32>
      %c0_19 = arith.constant 0 : index
      %c0_20 = arith.constant 0 : index
      %30 = vector.load %arg5[%c0_19, %c0_20] : memref<1x128xf32, #tpu.memory_space<vmem>>, vector<1x128xf32>
      %31 = arith.mulf %29, %30 : vector<1x128xf32>
      %c0_21 = arith.constant 0 : index
      %c0_22 = arith.constant 0 : index
      %32 = vector.load %arg6[%c0_21, %c0_22] : memref<1x128xf32, #tpu.memory_space<vmem>>, vector<1x128xf32>
      %33 = arith.mulf %19, %31 : vector<1x128xf32>
      %34 = arith.subf %32, %33 : vector<1x128xf32>
      %35 = vector.broadcast %31 : vector<1x128xf32> to vector<8x128xf32>
      %36 = arith.mulf %15, %35 : vector<8x128xf32>
      %37 = vector.broadcast %34 : vector<1x128xf32> to vector<8x128xf32>
      %38 = arith.addf %36, %37 : vector<8x128xf32>
      %cst_23 = arith.constant 2.000000e-01 : f32
      %39 = vector.broadcast %cst_23 : f32 to vector<8x128xf32>
      %40 = arith.mulf %39, %38 : vector<8x128xf32>
      %41 = arith.maximumf %38, %40 : vector<8x128xf32>
      %c0_24 = arith.constant 0 : index
      %c0_25 = arith.constant 0 : index
      %42 = vector.load %arg7[%c0_24, %c0_25] : memref<8x128xf32, #tpu.memory_space<vmem>>, vector<8x128xf32>
      tpu.vector_store %arg7[%c0_24, %c0_25], %41 {strides = array<i32>} : memref<8x128xf32, #tpu.memory_space<vmem>>, vector<8x128xf32>,
    } else {
    }
    return
  }
  func.func @transform_0(%arg0: i32, %arg1: i32) -> (i32, i32) {
    %c0_i32 = arith.constant 0 : i32
    %c0_i32_0 = arith.constant 0 : i32
    return %c0_i32, %arg1 : i32, i32
  }
  func.func @transform_1(%arg0: i32, %arg1: i32) -> (i32, i32) {
    %c0_i32 = arith.constant 0 : i32
    return %arg1, %arg0 : i32, i32
  }
  func.func @transform_2(%arg0: i32, %arg1: i32) -> (i32, i32) {
    %c0_i32 = arith.constant 0 : i32
    %c0_i32_0 = arith.constant 0 : i32
    return %c0_i32, %arg0 : i32, i32
  }
  func.func @transform_3(%arg0: i32, %arg1: i32) -> (i32, i32) {
    %c0_i32 = arith.constant 0 : i32
    %c0_i32_0 = arith.constant 0 : i32
    return %c0_i32, %arg0 : i32, i32
  }
  func.func @transform_4(%arg0: i32, %arg1: i32) -> (i32, i32) {
    %c0_i32 = arith.constant 0 : i32
    %c0_i32_0 = arith.constant 0 : i32
    return %c0_i32, %arg0 : i32, i32
  }
  func.func @transform_5(%arg0: i32, %arg1: i32) -> (i32, i32) {
    %c0_i32 = arith.constant 0 : i32
    %c0_i32_0 = arith.constant 0 : i32
    return %c0_i32, %arg0 : i32, i32
  }
}

</mosaic_0001>

<llo_original>
// kernel: tpu_custom_call.1
$region0: #{tpu_custom_call.1}
  #allocation0 [shape = 'u32[]', space=smem, size = 0x4, offset = 0x4, fixed_abs, tag = 'smem constant byte address 0x4 - core index']
  #allocation1 [shape = 'u32[72,128]{1,0:T(1,128)}', space=vmem, size = 0x9000, scoped, tag = 'internal scratch']
  #allocation2 [shape = 'f32[8,128]{1,0:T(8,128)}', space=vmem, size = 0x1000, scoped, tag = 'scratch operand']
  %s0 = inlined_call_operand.hbm [shape: f32[8,128], index: 0, kind: input, shape index: {}]
  %s1 = inlined_call_operand.hbm [shape: f32[128,128], index: 1, kind: input, shape index: {}]
  %s2 = inlined_call_operand.vmem [shape: f32[1,128], index: 2, kind: input, shape index: {}]
  %s3 = inlined_call_operand.vmem [shape: f32[1,128], index: 3, kind: input, shape index: {}]
  %s4 = inlined_call_operand.vmem [shape: f32[1,128], index: 4, kind: input, shape index: {}]
  %s5 = inlined_call_operand.hbm [shape: f32[8,128], index: 5, kind: output, shape index: {}]
  %s6 = sld [smem:[#allocation0]]
  $region46: #{tpu_custom_call.1} parent=0
    _
  %s8 = ssub.s32 1, %s6
  %s9 = scalar_select 0, %s8, %s6
  $region1: #{tpu_custom_call.1} parent=0
    #allocation3 [shape = 'u8[4096]{0}', space=vmem, size = 0x1000, scoped, tag = 'input window, operand 0, single buffered']
    #allocation4 [shape = 's32[1]{0}', space=sflag, size = 0x4, scoped, tag = 'scoped memory for tpu_custom_call.1']
    #allocation5 [shape = 's32[1]{0}', space=sflag, size = 0x4, scoped, tag = 'scoped memory for tpu_custom_call.1']
    #allocation6 [shape = 'u8[65536]{0}', space=vmem, size = 0x10000, scoped, tag = 'input window, operand 1, single buffered']
    #allocation7 [shape = 's32[1]{0}', space=sflag, size = 0x4, scoped, tag = 'scoped memory for tpu_custom_call.1']
    #allocation8 [shape = 'u8[4096]{0}', space=vmem, size = 0x1000, scoped, tag = 'output window, operand 0, single buffered']
    %10 = vsyncpa [#allocation4], 0
    %11 = vsyncpa [#allocation7], 0
    %12 = vsyncpa [#allocation5], 0
    // Predicated region
    $region2: #{tpu_custom_call.1} parent=1 // pred_check
      _
    $region3: #{tpu_custom_call.1} parent=1 // pred_check_branch
      %14 = sbr.rel (0) target = $region5
    $region4: #{tpu_custom_call.1} parent=1 // pred_region
      %16 = vsyncadd [#allocation4], 0
      %s18 = sshll.u32 %s0, 4
      %s19 = int_to_ptr.hbm [resolvable:$true] %s18
      %s20 = sshll.u32 [#allocation3], 4
      %s21 = int_to_ptr.vmem [resolvable:$true] %s20
      %23 = dma.hbm_to_vmem [thread:$0]  %s19, 128, %s21, [#allocation4]
    $region5: #{tpu_custom_call.1} parent=1 // pred_fallthru
      _
    // Predicated region
    $region6: #{tpu_custom_call.1} parent=1 // pred_check
      _
    $region7: #{tpu_custom_call.1} parent=1 // pred_check_branch
      %25 = sbr.rel (0) target = $region9
    $region8: #{tpu_custom_call.1} parent=1 // pred_region
      %27 = vsyncadd [#allocation7], 0
      %s28 = sshll.u32 %s1, 4
      %s29 = int_to_ptr.hbm [resolvable:$true] %s28
      %s30 = sshll.u32 [#allocation6], 4
      %s31 = int_to_ptr.vmem [resolvable:$true] %s30
      %36 = dma.hbm_to_vmem [thread:$0]  %s29, 2048, %s31, [#allocation7], 128, 128, 8
    $region9: #{tpu_custom_call.1} parent=1 // pred_fallthru
      _
    // Predicated region
    $region10: #{tpu_custom_call.1} parent=1 // pred_check
      _
    $region11: #{tpu_custom_call.1} parent=1 // pred_check_branch
      %38 = sbr.rel (0) target = $region13
    $region12: #{tpu_custom_call.1} parent=1 // pred_region
      _
    $region13: #{tpu_custom_call.1} parent=1 // pred_fallthru
      _
    // Predicated region
    $region14: #{tpu_custom_call.1} parent=1 // pred_check
      _
    $region15: #{tpu_custom_call.1} parent=1 // pred_check_branch
      %40 = sbr.rel (0) target = $region17
    $region16: #{tpu_custom_call.1} parent=1 // pred_region
      _
    $region17: #{tpu_custom_call.1} parent=1 // pred_fallthru
      _
    // Predicated region
    $region18: #{tpu_custom_call.1} parent=1 // pred_check
      _
    $region19: #{tpu_custom_call.1} parent=1 // pred_check_branch
      %42 = sbr.rel (0) target = $region21
    $region20: #{tpu_custom_call.1} parent=1 // pred_region
      _
    $region21: #{tpu_custom_call.1} parent=1 // pred_fallthru
      _
    // Predicated region
    $region22: #{tpu_custom_call.1} parent=1 // pred_check
      _
    $region23: #{tpu_custom_call.1} parent=1 // pred_check_branch
      %44 = sbr.rel (0) target = $region25
    $region24: #{tpu_custom_call.1} parent=1 // pred_region
      %46 = dma.done [#allocation4], 128
    $region25: #{tpu_custom_call.1} parent=1 // pred_fallthru
      _
    // Predicated region
    $region26: #{tpu_custom_call.1} parent=1 // pred_check
      _
    $region27: #{tpu_custom_call.1} parent=1 // pred_check_branch
      %48 = sbr.rel (0) target = $region29
    $region28: #{tpu_custom_call.1} parent=1 // pred_region
      %50 = dma.done [#allocation7], 2048
    $region29: #{tpu_custom_call.1} parent=1 // pred_fallthru
      _
    %p51 = scmp.eq.s32.totalorder 0, 0
    // Predicated region
    $region30: #{tpu_custom_call.1} parent=1 // pred_check
      %p52 = pneg %p51
    $region31: #{tpu_custom_call.1} parent=1 // pred_check_branch
      %54 = sbr.rel (%p52) target = $region33
    $region32: #{tpu_custom_call.1} parent=1 // pred_region
      %55 = vst [vmem:[#allocation2] sm:$0xff] 0.0
    $region33: #{tpu_custom_call.1} parent=1 // pred_fallthru
      _
    %v56 = vld [vmem:[#allocation2] sm:$0xff]
    %v57 = vld [vmem:[#allocation3] sm:$0xff]
    %v58 = vld [vmem:[#allocation6] sm:$0xff]
    %v59 = vld [vmem:[#allocation6 + $0x8] sm:$0xff]
    %v60 = vld [vmem:[#allocation6 + $0x10] sm:$0xff]
    %v61 = vld [vmem:[#allocation6 + $0x18] sm:$0xff]
    %v62 = vld [vmem:[#allocation6 + $0x20] sm:$0xff]
    %v63 = vld [vmem:[#allocation6 + $0x28] sm:$0xff]
    %v64 = vld [vmem:[#allocation6 + $0x30] sm:$0xff]
    %v65 = vld [vmem:[#allocation6 + $0x38] sm:$0xff]
    %v66 = vld [vmem:[#allocation6 + $0x40] sm:$0xff]
    %v67 = vld [vmem:[#allocation6 + $0x48] sm:$0xff]
    %v68 = vld [vmem:[#allocation6 + $0x50] sm:$0xff]
    %v69 = vld [vmem:[#allocation6 + $0x58] sm:$0xff]
    %v70 = vld [vmem:[#allocation6 + $0x60] sm:$0xff]
    %v71 = vld [vmem:[#allocation6 + $0x68] sm:$0xff]
    %v72 = vld [vmem:[#allocation6 + $0x70] sm:$0xff]
    %v73 = vld [vmem:[#allocation6 + $0x78] sm:$0xff]
    %74 = vmatpush.msra.mxu0 %v73
    %75 = vmatpush.msra.mxu0 %v72
    %76 = vmatpush.msra.mxu0 %v71
    %77 = vmatpush.msra.mxu0 %v70
    %78 = vmatpush.msra.mxu0 %v69
    %79 = vmatpush.msra.mxu0 %v68
    %80 = vmatpush.msra.mxu0 %v67
    %81 = vmatpush.msra.mxu0 %v66
    %82 = vmatpush.msra.mxu0 %v65
    %83 = vmatpush.msra.mxu0 %v64
    %84 = vmatpush.msra.mxu0 %v63
    %85 = vmatpush.msra.mxu0 %v62
    %86 = vmatpush.msra.mxu0 %v61
    %87 = vmatpush.msra.mxu0 %v60
    %88 = vmatpush.msra.mxu0 %v59
    %89 = vmatpush.msra.mxu0 %v58
    %90 = vmatmul.f32.gmra.mxu0 %v57
    %v91 = vpop.f32.mrf.mxu0
    %v92 = vadd.f32 0.0, %v91
    %93 = vdwg.mxu0
    %v94 = vadd.f32 %v56, %v92
    %95 = vst [vmem:[#allocation2] sm:$0xff] %v94
    // Predicated region
    $region34: #{tpu_custom_call.1} parent=1 // pred_check
      %p96 = pneg %p51
    $region35: #{tpu_custom_call.1} parent=1 // pred_check_branch
      %98 = sbr.rel (%p96) target = $region37
    $region36: #{tpu_custom_call.1} parent=1 // pred_region
      %v99 = vld [vmem:[#allocation2] sm:$0xff]
      %v100 = vld [vmem:[%s2] sm:$0x1]
      %v102 = vperm.slane %v100, 0
      %v104 = vadd.f32 %v99, %v102
      %v105 = vrot.slane %v104, 4
      %v106 = vadd.f32 %v104, %v105
      %v107 = vrot.slane %v106, 2
      %v108 = vadd.f32 %v106, %v107
      %v109 = vrot.slane %v108, 1
      %v110 = vadd.f32 %v108, %v109
      %v111 = vrcp.pop 8.0
      %v112 = vmul.f32 8.0, %v111
      %v113 = vsub.f32 1.0, %v112
      %v114 = vmul.f32 %v111, %v113
      %v115 = vadd.f32 %v111, %v114
      %vm116 = vweird.f32 %v111
      %v117 = vsel %vm116, %v111, %v115
      %v118 = vmul.f32 %v110, %v117
      %v119 = vsub.f32 %v104, %v118
      %v120 = vmul.f32 %v119, %v119
      %v121 = vrot.slane %v120, 4
      %v122 = vadd.f32 %v120, %v121
      %v123 = vrot.slane %v122, 2
      %v124 = vadd.f32 %v122, %v123
      %v125 = vrot.slane %v124, 1
      %v126 = vadd.f32 %v124, %v125
      %v127 = vmul.f32 %v126, %v117
      %v128 = vadd.f32 %v127, 1e-05
      %v129 = vrsqrt.pop %v128
      %v130 = vmul.f32 %v129, %v128
      %v131 = vmul.f32 %v130, %v129
      %v132 = vmul.f32 0.5, %v131
      %v133 = vsub.f32 1.5, %v132
      %v134 = vmul.f32 %v129, %v133
      %vm135 = vweird.f32 %v128
      %vm136 = vweird.f32 %v129
      %vm137 = vmor %vm135, %vm136
      %v138 = vsel %vm137, %v129, %v134
      %v139 = vld [vmem:[%s3] sm:$0x1]
      %v140 = vmul.f32 %v138, %v139
      %v141 = vld [vmem:[%s4] sm:$0x1]
      %v142 = vmul.f32 %v118, %v140
      %v143 = vsub.f32 %v141, %v142
      %v144 = vperm.slane %v140, 0
      %v145 = vmul.f32 %v104, %v144
      %v147 = vperm.slane %v143, 0
      %v149 = vadd.f32 %v145, %v147
      %v150 = vmul.f32 %v149, 0.2
      %v151 = vmax.f32 %v149, %v150
      %152 = vst [vmem:[#allocation8] sm:$0xff] %v151
    $region37: #{tpu_custom_call.1} parent=1 // pred_fallthru
      _
    // Predicated region
    $region38: #{tpu_custom_call.1} parent=1 // pred_check
      _
    $region39: #{tpu_custom_call.1} parent=1 // pred_check_branch
      %154 = sbr.rel (0) target = $region41
    $region40: #{tpu_custom_call.1} parent=1 // pred_region
      %156 = vsyncadd [#allocation5], 0
      %s158 = sshll.u32 [#allocation8], 4
      %s159 = int_to_ptr.vmem [resolvable:$true] %s158
      %s160 = sshll.u32 %s5, 4
      %s161 = int_to_ptr.hbm [resolvable:$true] %s160
      %163 = dma.vmem_to_hbm [thread:$0]  %s159, 128, %s161, [#allocation5]
    $region41: #{tpu_custom_call.1} parent=1 // pred_fallthru
      _
    // Predicated region
    $region42: #{tpu_custom_call.1} parent=1 // pred_check
      _
    $region43: #{tpu_custom_call.1} parent=1 // pred_check_branch
      %165 = sbr.rel (0) target = $region45
    $region44: #{tpu_custom_call.1} parent=1 // pred_region
      %167 = dma.done [#allocation5], 128
    $region45: #{tpu_custom_call.1} parent=1 // pred_fallthru
      _
    %168 = vsyncpa [#allocation4], 1
    %169 = vsyncpa [#allocation7], 1
    %170 = vsyncpa [#allocation5], 1

</llo_original>
